<compile_context>
chip_gen: v7x
topology: tpu7x:2x2x1
jax: 0.10.0
libtpu: 0.0.40
codegen_flags: <defaults>
</compile_context>

<pallas_src>
import functools

import numpy as np
import jax
import jax.numpy as jnp
from jax import lax
from jax.experimental import pallas as pl
from jax.experimental.pallas import tpu as pltpu

_BN_EPS = 1e-5
_LANE = 128


def _round_up(x, m):
    return (x + m - 1) // m * m


def _pick_batch_block(n, oh, target_rows=256):
    """Smallest divisor of n whose stacked matmul M = bblk*OH reaches target_rows (else whole batch)."""
    for d in range(1, n + 1):
        if n % d == 0 and d * oh >= target_rows:
            return d
    return n


def _vmem_limit(buffer_bytes):
    """Generation-aware scoped-VMEM budget: actual buffer need (x2 headroom, >=16 MiB floor),
    capped at ~70% of physical VMEM (important on v7x's 64 MiB per TensorCore)."""
    try:
        cap = pltpu.get_tpu_info().vmem_capacity_bytes
    except Exception:
        cap = 64 * 1024 * 1024  # conservative fallback (v7x per-TC physical VMEM)
    return int(min(0.7 * cap, max(16 * 1024 * 1024, 2 * buffer_bytes)))


# ---------------------------------------------------------------------------
# Kernels
# ---------------------------------------------------------------------------

def _conv_stats_kernel(x_ref, scale_ref, shift_ref, w_ref, y_ref, s_ref, *, kh, oh, fuse_bn):
    """Fused (previous layer BN-apply + ReLU) -> conv as ONE MXU contraction -> batch statistics.

    x_ref:     (B, H, RLin)   bf16 (interior layers: previous pre-activation) or f32 (first layer)
    scale_ref: (1, RLin) f32  previous layer's folded BN scale per column (zero in pad lanes)
    shift_ref: (1, RLin) f32  previous layer's folded BN shift per column
    w_ref:     (KH*RLin, RLout) bf16   Toeplitz conv weight, resident & single-buffered
    y_ref:     (B, OH, RLout) bf16     this layer's pre-activation
    s_ref:     (1, 2, RLout)  f32      [sum(y), sum(y*y)] over this grid step's B*OH rows
    """
    x = x_ref[...]
    if fuse_bn:
        # Previous layer's BatchNorm affine + ReLU, applied in f32 on load (no extra HBM round trip).
        a = jnp.maximum(x.astype(jnp.float32) * scale_ref[...] + shift_ref[...], 0.0)
        xb = a.astype(jnp.bfloat16)
    else:
        xb = x.astype(jnp.bfloat16)          # single hoisted cast (MXU operand only)

    bblk = x_ref.shape[0]
    rl_in = x_ref.shape[-1]
    rl_out = w_ref.shape[-1]

    # Implicit im2row in VMEM: stack the KH row-shifted slices along K and collapse (B, OH) into M,
    # so the whole convolution is a single MXU contraction (M = B*OH, K = KH*RLin, f32 accumulate).
    lhs = jnp.concatenate([xb[:, i:i + oh, :] for i in range(kh)], axis=-1)   # (B, OH, KH*RLin)
    lhs = lhs.reshape(bblk * oh, kh * rl_in)
    acc = jnp.dot(lhs, w_ref[...], preferred_element_type=jnp.float32)        # (B*OH, RLout) f32

    y_ref[...] = acc.reshape(bblk, oh, rl_out).astype(y_ref.dtype)
    s_ref[0] = jnp.concatenate(
        [jnp.sum(acc, axis=0, keepdims=True),
         jnp.sum(acc * acc, axis=0, keepdims=True)], axis=0)


def _bn_relu_kernel(y_ref, scale_ref, shift_ref, o_ref):
    """Final layer only: folded per-column BatchNorm scale/shift + ReLU, lane-dense f32 store."""
    o_ref[...] = jnp.maximum(
        y_ref[...].astype(jnp.float32) * scale_ref[...] + shift_ref[...], 0.0)


# ---------------------------------------------------------------------------
# Host-side parameter preparation
# ---------------------------------------------------------------------------

def _toeplitz_weight(weight, w_in, rl_in, rl_out):
    """(Cout, Cin, KH, KW) conv weight -> (KH*RLin, RLout) bf16 compact-packed Toeplitz matrix.

    Activation row layout: column w*Cin + c holds pixel (w, channel c); the row is zero padded once
    at the end to RLin (multiple of 128).  Output columns: o*Cout + m, padded to RLout.
    """
    cout, cin, kh, kw = weight.shape
    ow = w_in - kw + 1
    wt = np.asarray(weight, np.float32)
    mat = np.zeros((kh, rl_in, rl_out), np.float32)
    for i in range(kh):
        for j in range(kw):
            blk = wt[:, :, i, j].T                       # (Cin, Cout)
            for o in range(ow):
                w = o + j
                mat[i, w * cin:(w + 1) * cin, o * cout:(o + 1) * cout] = blk
    return jnp.asarray(mat.reshape(kh * rl_in, rl_out), jnp.bfloat16)


def init_enc_conv_block_params(key, n_inp, n_points, past_t, hidden_dim, num_conv):
    """Deterministic synthetic parameters matching EncConvBlock.__init__ shapes."""
    features = [n_inp] + [hidden_dim * n_points for _ in range(num_conv)]
    params = []
    for i in range(len(features) - 1):
        cin, cout = features[i], features[i + 1]
        key, kw_, kb_ = jax.random.split(key, 3)
        fan_in = cin * past_t * n_points
        scale = 1.0 / jnp.sqrt(jnp.float32(fan_in))
        weight = jax.random.uniform(kw_, (cout, cin, past_t, n_points),
                                    jnp.float32, -scale, scale)
        # Conv bias kept for parameter-shape parity with the PyTorch module, but NOT applied: a
        # per-channel constant cancels exactly under training-mode BatchNorm.
        bias = jax.random.uniform(kb_, (cout,), jnp.float32, -scale, scale)
        gamma = jnp.ones((cout,), jnp.float32)    # BatchNorm affine weight (init 1)
        beta = jnp.zeros((cout,), jnp.float32)    # BatchNorm affine bias (init 0)
        params.append((weight, bias, gamma, beta))
    return params
    # TODO(synk): BatchNorm running_mean/running_var buffer updates (training-side state) are not
    # materialized; the forward output matches PyTorch training-mode forward.


def prepare_enc_conv_block(params, h, w):
    """Precompute compact-packed Toeplitz weights and BN affine params per layer."""
    prepped = []
    for (weight, _bias, gamma, beta) in params:   # bias dropped (cancels under train-mode BN)
        cout, cin, kh, kw = weight.shape
        rl_in = _round_up(w * cin, _LANE)
        rl_out = _round_up((w - kw + 1) * cout, _LANE)
        prepped.append(dict(
            wtoe=_toeplitz_weight(weight, w, rl_in, rl_out),
            gamma=jnp.asarray(gamma, jnp.float32),
            beta=jnp.asarray(beta, jnp.float32),
            kh=kh, kw=kw, h=h, w=w, rl_in=rl_in, rl_out=rl_out, cin=cin, cout=cout))
        h, w = h - kh + 1, w - kw + 1
    return prepped


# ---------------------------------------------------------------------------
# Layer / block forward
# ---------------------------------------------------------------------------

def _conv_stats_pass(x, wtoe, scale_row, shift_row, *, kh, h, oh, rl_in, rl_out, fuse_bn, bblk):
    """One fused (prev BN+ReLU) + Conv + stats pass over the whole batch (grid over batch blocks)."""
    n = x.shape[0]
    nsteps = n // bblk
    buf_bytes = (wtoe.size * 2                                 # resident bf16 weight, single-buffered
                 + 2 * bblk * h * rl_in * x.dtype.itemsize     # double-buffered input tile
                 + 2 * bblk * oh * rl_out * 2                  # double-buffered bf16 output tile
                 + 2 * 2 * rl_out * 4 + 2 * 2 * rl_in * 4)     # stats + scale/shift
    # NOTE: for very large Toeplitz weights (> ~24-32 MiB, e.g. on v7x) the RLout dimension of the
    # weight should additionally be tiled with its own grid axis; not needed at these sizes.
    return pl.pallas_call(
        functools.partial(_conv_stats_kernel, kh=kh, oh=oh, fuse_bn=fuse_bn),
        grid=(nsteps,),
        in_specs=[
            pl.BlockSpec((bblk, h, rl_in), lambda g: (g, 0, 0)),
            pl.BlockSpec((1, rl_in), lambda g: (0, 0)),
            pl.BlockSpec((1, rl_in), lambda g: (0, 0)),
            # Constant block index -> keep the Toeplitz weight resident and single-buffered.
            pl.BlockSpec((kh * rl_in, rl_out), lambda g: (0, 0), pipeline_mode=pl.Buffered(1)),
        ],
        out_specs=(
            pl.BlockSpec((bblk, oh, rl_out), lambda g: (g, 0, 0)),
            pl.BlockSpec((1, 2, rl_out), lambda g: (g, 0, 0)),
        ),
        out_shape=(
            jax.ShapeDtypeStruct((n, oh, rl_out), jnp.bfloat16),   # bf16 inter-layer activation
            jax.ShapeDtypeStruct((nsteps, 2, rl_out), jnp.float32),
        ),
        compiler_params=pltpu.CompilerParams(
            dimension_semantics=("parallel",),
            vmem_limit_bytes=_vmem_limit(buf_bytes)),
    )(x, scale_row, shift_row, wtoe)


def _fold_bn(stats, gamma, beta, *, ow, cout, rl_out, count):
    """Tiny reduction: fold per-step/per-column sums into per-column BN scale/shift rows."""
    s = stats.sum(axis=0)                                    # (2, RLout)
    sc = s[:, :ow * cout].reshape(2, ow, cout).sum(axis=1)   # fold W positions -> per channel
    mean = sc[0] / count
    # Single-pass E[y^2]-mean^2 (clamped); cancellation-prone if |mean| >> std, acceptable here.
    var = jnp.maximum(sc[1] / count - mean * mean, 0.0)      # biased variance (BN training mode)
    scale_c = gamma * lax.rsqrt(var + _BN_EPS)
    shift_c = beta - scale_c * mean
    scale_row = jnp.zeros((rl_out,), jnp.float32).at[:ow * cout].set(jnp.tile(scale_c, ow))
    shift_row = jnp.zeros((rl_out,), jnp.float32).at[:ow * cout].set(jnp.tile(shift_c, ow))
    return scale_row.reshape(1, rl_out), shift_row.reshape(1, rl_out)


def enc_conv_block_forward(x_nchw, prepped):
    n, c, h, w = x_nchw.shape
    rl0 = prepped[0]["rl_in"]
    # NCHW -> compact lane-padded row layout (N, H, W*Cin padded once to a multiple of 128 lanes);
    # done exactly once at the block boundary.
    x = jnp.transpose(x_nchw, (0, 2, 3, 1)).reshape(n, h, w * c)
    x = jnp.pad(x, ((0, 0), (0, 0), (0, rl0 - w * c)))

    scale_row = jnp.ones((1, rl0), jnp.float32)    # unused on the first layer (fuse_bn=False)
    shift_row = jnp.zeros((1, rl0), jnp.float32)
    fuse_bn = False
    for p in prepped:
        oh, ow = p["h"] - p["kh"] + 1, p["w"] - p["kw"] + 1
        bblk = _pick_batch_block(n, oh)
        x, stats = _conv_stats_pass(
            x, p["wtoe"], scale_row, shift_row,
            kh=p["kh"], h=p["h"], oh=oh, rl_in=p["rl_in"], rl_out=p["rl_out"],
            fuse_bn=fuse_bn, bblk=bblk)
        scale_row, shift_row = _fold_bn(
            stats, p["gamma"], p["beta"],
            ow=ow, cout=p["cout"], rl_out=p["rl_out"], count=jnp.float32(n * oh * ow))
        fuse_bn = True

    # Standalone BN-apply + ReLU only for the final layer (interior layers were fused above).
    last = prepped[-1]
    oh, ow = last["h"] - last["kh"] + 1, last["w"] - last["kw"] + 1
    rl = last["rl_out"]
    bblk = _pick_batch_block(n, oh)
    out = pl.pallas_call(
        _bn_relu_kernel,
        grid=(n // bblk,),
        in_specs=[
            pl.BlockSpec((bblk, oh, rl), lambda g: (g, 0, 0)),
            pl.BlockSpec((1, rl), lambda g: (0, 0)),
            pl.BlockSpec((1, rl), lambda g: (0, 0)),
        ],
        out_specs=pl.BlockSpec((bblk, oh, rl), lambda g: (g, 0, 0)),
        out_shape=jax.ShapeDtypeStruct((n, oh, rl), jnp.float32),
        compiler_params=pltpu.CompilerParams(
            dimension_semantics=("parallel",),
            vmem_limit_bytes=_vmem_limit(2 * bblk * oh * rl * 6 + 2 * 2 * rl * 4)),
    )(x, scale_row, shift_row)

    # Slice off the zero padded columns and convert back to NCHW once at the end.
    out = out[:, :, :ow * last["cout"]].reshape(n, oh, ow, last["cout"])
    return jnp.transpose(out, (0, 3, 1, 2))


if __name__ == "__main__":
    # Small shapes consistent with the module:
    n_inp, n_points, past_t, hidden_dim, num_conv = 4, 2, 3, 8, 2
    N, H, W = 2, 8, 4  # spatial dims large enough for num_conv valid (past_t, n_points) convs

    key = jax.random.PRNGKey(0)
    key, kx = jax.random.split(key)
    x = jax.random.normal(kx, (N, n_inp, H, W), dtype=jnp.float32)

    params = init_enc_conv_block_params(key, n_inp, n_points, past_t, hidden_dim, num_conv)
    prepped = prepare_enc_conv_block(params, H, W)

    out = enc_conv_block_forward(x, prepped)
    jax.block_until_ready(out)

    expected = (N, hidden_dim * n_points,
                H - num_conv * (past_t - 1),
                W - num_conv * (n_points - 1))
    assert out.shape == expected, (out.shape, expected)
    assert bool(jnp.all(out >= 0.0))  # ReLU output
    print("KERNEL_OK")
</pallas_src>

<mosaic_0001>
module attributes {stable_mosaic.version = 11 : i64} {
  func.func @_conv_stats_kernel(%arg0: i32, %arg1: memref<2x8x128xf32, #tpu.memory_space<vmem>>, %arg2: memref<1x128xf32, #tpu.memory_space<vmem>>, %arg3: memref<1x128xf32, #tpu.memory_space<vmem>>, %arg4: memref<384x128xbf16, #tpu.memory_space<vmem>>, %arg5: memref<2x6x128xbf16, #tpu.memory_space<vmem>>, %arg6: memref<1x2x128xf32, #tpu.memory_space<vmem>>) attributes {dimension_semantics = [#tpu.dimension_semantics<parallel>], iteration_bounds = array<i64: 1>, scalar_prefetch = 0 : i64, scratch_operands = 0 : i64, tpu.core_type = #tpu.core_type<tc>, window_params = [{transform_indices = @transform_0, window_bounds = array<i64: 2, 8, 128>}, {pipeline_mode = #tpu.pipeline_mode<synchronous>, transform_indices = @transform_1, window_bounds = array<i64: 1, 128>}, {pipeline_mode = #tpu.pipeline_mode<synchronous>, transform_indices = @transform_2, window_bounds = array<i64: 1, 128>}, {pipeline_mode = #tpu.pipeline_mode<synchronous>, transform_indices = @transform_3, window_bounds = array<i64: 384, 128>}, {transform_indices = @transform_4, window_bounds = array<i64: 2, 6, 128>}, {transform_indices = @transform_5, window_bounds = array<i64: 1, 2, 128>}]} {
    %c0 = arith.constant 0 : index
    %c0_0 = arith.constant 0 : index
    %c0_1 = arith.constant 0 : index
    %0 = vector.load %arg1[%c0, %c0_0, %c0_1] : memref<2x8x128xf32, #tpu.memory_space<vmem>>, vector<2x8x128xf32>
    %1 = arith.truncf %0 : vector<2x8x128xf32> to vector<2x8x128xbf16>
    %2 = vector.extract_strided_slice %1 {offsets = [0, 0, 0], sizes = [2, 6, 128], strides = [1, 1, 1]} : vector<2x8x128xbf16> to vector<2x6x128xbf16>
    %3 = vector.extract_strided_slice %1 {offsets = [0, 1, 0], sizes = [2, 6, 128], strides = [1, 1, 1]} : vector<2x8x128xbf16> to vector<2x6x128xbf16>
    %4 = vector.extract_strided_slice %1 {offsets = [0, 2, 0], sizes = [2, 6, 128], strides = [1, 1, 1]} : vector<2x8x128xbf16> to vector<2x6x128xbf16>
    %5 = tpu.concatenate %2, %3, %4 in 2 : vector<2x6x128xbf16>, vector<2x6x128xbf16>, vector<2x6x128xbf16> -> vector<2x6x384xbf16>
    %6 = vector.shape_cast %5 : vector<2x6x384xbf16> to vector<12x384xbf16>
    %c0_2 = arith.constant 0 : index
    %c0_3 = arith.constant 0 : index
    %7 = vector.load %arg4[%c0_2, %c0_3] : memref<384x128xbf16, #tpu.memory_space<vmem>>, vector<384x128xbf16>
    %cst = arith.constant dense<0.000000e+00> : vector<12x128xf32>
    %8 = tpu.matmul %6, %7, %cst {dimension_numbers = #tpu.dot_dimension_numbers<[1], [0], [0], [1], [0, 0, 1, 1], [], []>} : vector<12x384xbf16>, vector<384x128xbf16>, vector<12x128xf32> -> vector<12x128xf32>
    %9 = vector.shape_cast %8 : vector<12x128xf32> to vector<2x6x128xf32>
    %10 = arith.truncf %9 : vector<2x6x128xf32> to vector<2x6x128xbf16>
    %c0_4 = arith.constant 0 : index
    %c0_5 = arith.constant 0 : index
    %c0_6 = arith.constant 0 : index
    %11 = vector.load %arg5[%c0_4, %c0_5, %c0_6] : memref<2x6x128xbf16, #tpu.memory_space<vmem>>, vector<2x6x128xbf16>
    tpu.vector_store %arg5[%c0_4, %c0_5, %c0_6], %10 {strides = array<i32>} : memref<2x6x128xbf16, #tpu.memory_space<vmem>>, vector<2x6x128xbf16>,
    %cst_7 = arith.constant dense<0.000000e+00> : vector<128xf32>
    %12 = vector.multi_reduction <add>, %8, %cst_7 [0] : vector<12x128xf32> to vector<128xf32>
    %13 = vector.shape_cast %12 : vector<128xf32> to vector<1x128xf32>
    %14 = arith.mulf %8, %8 : vector<12x128xf32>
    %cst_8 = arith.constant dense<0.000000e+00> : vector<128xf32>
    %15 = vector.multi_reduction <add>, %14, %cst_8 [0] : vector<12x128xf32> to vector<128xf32>
    %16 = vector.shape_cast %15 : vector<128xf32> to vector<1x128xf32>
    %17 = tpu.concatenate %13, %16 in 0 : vector<1x128xf32>, vector<1x128xf32> -> vector<2x128xf32>
    %c0_9 = arith.constant 0 : index
    %c0_10 = arith.constant 0 : index
    %c0_11 = arith.constant 0 : index
    %18 = vector.load %arg6[%c0_9, %c0_10, %c0_11] : memref<1x2x128xf32, #tpu.memory_space<vmem>>, vector<1x2x128xf32>
    %19 = vector.shape_cast %18 : vector<1x2x128xf32> to vector<2x128xf32>
    %20 = vector.shape_cast %17 : vector<2x128xf32> to vector<1x2x128xf32>
    tpu.vector_store %arg6[%c0_9, %c0_10, %c0_11], %20 {strides = array<i32>} : memref<1x2x128xf32, #tpu.memory_space<vmem>>, vector<1x2x128xf32>,
    return
  }
  func.func @transform_0(%arg0: i32) -> (i32, i32, i32) {
    %c0_i32 = arith.constant 0 : i32
    %c0_i32_0 = arith.constant 0 : i32
    %c0_i32_1 = arith.constant 0 : i32
    return %arg0, %c0_i32, %c0_i32_0 : i32, i32, i32
  }
  func.func @transform_1(%arg0: i32) -> (i32, i32) {
    %c0_i32 = arith.constant 0 : i32
    %c0_i32_0 = arith.constant 0 : i32
    %c0_i32_1 = arith.constant 0 : i32
    return %c0_i32, %c0_i32_0 : i32, i32
  }
  func.func @transform_2(%arg0: i32) -> (i32, i32) {
    %c0_i32 = arith.constant 0 : i32
    %c0_i32_0 = arith.constant 0 : i32
    %c0_i32_1 = arith.constant 0 : i32
    return %c0_i32, %c0_i32_0 : i32, i32
  }
  func.func @transform_3(%arg0: i32) -> (i32, i32) {
    %c0_i32 = arith.constant 0 : i32
    %c0_i32_0 = arith.constant 0 : i32
    %c0_i32_1 = arith.constant 0 : i32
    return %c0_i32, %c0_i32_0 : i32, i32
  }
  func.func @transform_4(%arg0: i32) -> (i32, i32, i32) {
    %c0_i32 = arith.constant 0 : i32
    %c0_i32_0 = arith.constant 0 : i32
    %c0_i32_1 = arith.constant 0 : i32
    return %arg0, %c0_i32, %c0_i32_0 : i32, i32, i32
  }
  func.func @transform_5(%arg0: i32) -> (i32, i32, i32) {
    %c0_i32 = arith.constant 0 : i32
    %c0_i32_0 = arith.constant 0 : i32
    %c0_i32_1 = arith.constant 0 : i32
    return %arg0, %c0_i32, %c0_i32_0 : i32, i32, i32
  }
}

</mosaic_0001>

<llo_original>
// kernel: tpu_custom_call.1
$region0: #{tpu_custom_call.1}
  #allocation0 [shape = 'u32[]', space=smem, size = 0x4, offset = 0x4, fixed_abs, tag = 'smem constant byte address 0x4 - core index']
  #allocation1 [shape = 'u32[144,128]{1,0:T(1,128)}', space=vmem, size = 0x12000, scoped, tag = 'internal scratch']
  %s0 = inlined_call_operand.hbm [shape: f32[2,8,128], index: 0, kind: input, shape index: {}]
  %s1 = inlined_call_operand.vmem [shape: f32[1,128], index: 1, kind: input, shape index: {}]
  %s2 = inlined_call_operand.vmem [shape: f32[1,128], index: 2, kind: input, shape index: {}]
  %s3 = inlined_call_operand.hbm [shape: bf16[384,128], index: 3, kind: input, shape index: {}]
  %s4 = inlined_call_operand.vmem [shape: bf16[2,6,128], index: 4, kind: output, shape index: {0}]
  %s5 = inlined_call_operand.hbm [shape: f32[1,2,128], index: 5, kind: output, shape index: {1}]
  %6 = xla_tuple %s4, %s5
  %s7 = sld [smem:[#allocation0]]
  $region42: #{tpu_custom_call.1} parent=0
    _
  %s9 = ssub.s32 1, %s7
  %s10 = scalar_select 0, %s9, %s7
  $region1: #{tpu_custom_call.1} parent=0
    #allocation2 [shape = 'u8[8192]{0}', space=vmem, size = 0x2000, scoped, tag = 'input window, operand 0, single buffered']
    #allocation3 [shape = 's32[1]{0}', space=sflag, size = 0x4, scoped, tag = 'scoped memory for tpu_custom_call.1']
    #allocation4 [shape = 's32[1]{0}', space=sflag, size = 0x4, scoped, tag = 'scoped memory for tpu_custom_call.1']
    #allocation5 [shape = 'u8[98304]{0}', space=vmem, size = 0x18000, scoped, tag = 'input window, operand 3, single buffered']
    #allocation6 [shape = 's32[1]{0}', space=sflag, size = 0x4, scoped, tag = 'scoped memory for tpu_custom_call.1']
    #allocation7 [shape = 'u8[1024]{0}', space=vmem, size = 0x400, scoped, tag = 'output window, operand 1, single buffered']
    %11 = vsyncpa [#allocation3], 0
    %12 = vsyncpa [#allocation6], 0
    %13 = vsyncpa [#allocation4], 0
    // Predicated region
    $region2: #{tpu_custom_call.1} parent=1 // pred_check
      _
    $region3: #{tpu_custom_call.1} parent=1 // pred_check_branch
      %15 = sbr.rel (0) target = $region5
    $region4: #{tpu_custom_call.1} parent=1 // pred_region
      %s17 = ssub.s32 256, 256
      %18 = vsyncadd [#allocation3], %s17
      %s19 = sshll.u32 [#allocation2], 4
      %s20 = int_to_ptr.vmem [resolvable:$true] %s19
      %25 = dma.hbm_to_vmem [thread:$0]  %s0, 256, %s20, [#allocation3], 128, 128, 8
    $region5: #{tpu_custom_call.1} parent=1 // pred_fallthru
      _
    // Predicated region
    $region6: #{tpu_custom_call.1} parent=1 // pred_check
      _
    $region7: #{tpu_custom_call.1} parent=1 // pred_check_branch
      %27 = sbr.rel (0) target = $region9
    $region8: #{tpu_custom_call.1} parent=1 // pred_region
      _
    $region9: #{tpu_custom_call.1} parent=1 // pred_fallthru
      _
    // Predicated region
    $region10: #{tpu_custom_call.1} parent=1 // pred_check
      _
    $region11: #{tpu_custom_call.1} parent=1 // pred_check_branch
      %29 = sbr.rel (0) target = $region13
    $region12: #{tpu_custom_call.1} parent=1 // pred_region
      _
    $region13: #{tpu_custom_call.1} parent=1 // pred_fallthru
      _
    // Predicated region
    $region14: #{tpu_custom_call.1} parent=1 // pred_check
      _
    $region15: #{tpu_custom_call.1} parent=1 // pred_check_branch
      %31 = sbr.rel (0) target = $region17
    $region16: #{tpu_custom_call.1} parent=1 // pred_region
      %s33 = ssub.s32 3072, 3072
      %34 = vsyncadd [#allocation6], %s33
      %s35 = sshll.u32 [#allocation5], 4
      %s36 = int_to_ptr.vmem [resolvable:$true] %s35
      %41 = dma.hbm_to_vmem [thread:$0]  %s3, 3072, %s36, [#allocation6], 64, 64, 4
    $region17: #{tpu_custom_call.1} parent=1 // pred_fallthru
      _
    // Predicated region
    $region18: #{tpu_custom_call.1} parent=1 // pred_check
      _
    $region19: #{tpu_custom_call.1} parent=1 // pred_check_branch
      %43 = sbr.rel (0) target = $region21
    $region20: #{tpu_custom_call.1} parent=1 // pred_region
      %44 = dma.done [#allocation3], 256
    $region21: #{tpu_custom_call.1} parent=1 // pred_fallthru
      _
    // Predicated region
    $region22: #{tpu_custom_call.1} parent=1 // pred_check
      _
    $region23: #{tpu_custom_call.1} parent=1 // pred_check_branch
      %46 = sbr.rel (0) target = $region25
    $region24: #{tpu_custom_call.1} parent=1 // pred_region
      %47 = dma.done [#allocation6], 3072
    $region25: #{tpu_custom_call.1} parent=1 // pred_fallthru
      _
    %v49 = vld [vmem:[#allocation2] sm:$0xff]
    %v50 = vld [vmem:[#allocation2 + $0x8] sm:$0xff]
    %v51 = vpack.c.bf16 %v49, %v49
    %v52 = vpack.c.bf16 %v50, %v50
    %v54 = vshrl.u32 %v51, 16
    %v56 = vshll.u32 %v51, 16
    %v58 = vrot.slane %v56, 1
    %v59 = vor.u32 %v54, %v58
    %v61 = vshrl.u32 %v52, 16
    %v63 = vshll.u32 %v52, 16
    %v65 = vrot.slane %v63, 1
    %v66 = vor.u32 %v61, %v65
    %v69 = vrot.slane %v51, 1
    %v70 = vrot.slane %v52, 1
    %v71 = vcombine.low %v51, %v59
    %v73 = vunpack.c.l.s4 1966171168
    %v74 = vunpack.c.0.s8 %v73
    %v75 = vlaneseq
    %v76 = vshrl.u32 %v75, 7
    %v77 = vsub.s32 %v74, %v76
    %v78 = vrot.slane %v71, %v77
    %v80 = vunpack.c.l.s4 1966171168
    %v81 = vunpack.c.0.s8 %v80
    %v82 = vlaneseq
    %v83 = vshrl.u32 %v82, 7
    %v84 = vsub.s32 %v81, %v83
    %v85 = vrot.slane %v69, %v84
    %v86 = vcombine.low %v78, %v85
    %v87 = vcombine.high %v78, %v85
    %v89 = vunpack.c.l.s4 1966171168
    %v90 = vunpack.c.0.s8 %v89
    %v91 = vlaneseq
    %v92 = vshrl.u32 %v91, 7
    %v93 = vsub.s32 %v90, %v92
    %v94 = vrot.slane %v86, %v93
    %v96 = vunpack.c.l.s4 1966171168
    %v97 = vunpack.c.0.s8 %v96
    %v98 = vlaneseq
    %v99 = vshrl.u32 %v98, 7
    %v100 = vsub.s32 %v97, %v99
    %v101 = vrot.slane %v87, %v100
    %v102 = vcombine.high %v94, %v94
    %v103 = vcombine.low %v52, %v66
    %v105 = vunpack.c.l.s4 1966171168
    %v106 = vunpack.c.0.s8 %v105
    %v107 = vlaneseq
    %v108 = vshrl.u32 %v107, 7
    %v109 = vsub.s32 %v106, %v108
    %v110 = vrot.slane %v103, %v109
    %v112 = vunpack.c.l.s4 1966171168
    %v113 = vunpack.c.0.s8 %v112
    %v114 = vlaneseq
    %v115 = vshrl.u32 %v114, 7
    %v116 = vsub.s32 %v113, %v115
    %v117 = vrot.slane %v70, %v116
    %v118 = vcombine.low %v110, %v117
    %v119 = vcombine.high %v110, %v117
    %v121 = vunpack.c.l.s4 1966171168
    %v122 = vunpack.c.0.s8 %v121
    %v123 = vlaneseq
    %v124 = vshrl.u32 %v123, 7
    %v125 = vsub.s32 %v122, %v124
    %v126 = vrot.slane %v118, %v125
    %v128 = vunpack.c.l.s4 1966171168
    %v129 = vunpack.c.0.s8 %v128
    %v130 = vlaneseq
    %v131 = vshrl.u32 %v130, 7
    %v132 = vsub.s32 %v129, %v131
    %v133 = vrot.slane %v119, %v132
    %v134 = vcombine.high %v126, %v126
    %v135 = vld [vmem:[#allocation5] sm:$0xf]
    %v136 = vld [vmem:[#allocation5 + $0x4] sm:$0xf]
    %v137 = vld [vmem:[#allocation5 + $0x8] sm:$0xf]
    %v138 = vld [vmem:[#allocation5 + $0xc] sm:$0xf]
    %v139 = vld [vmem:[#allocation5 + $0x10] sm:$0xf]
    %v140 = vld [vmem:[#allocation5 + $0x14] sm:$0xf]
    %v141 = vld [vmem:[#allocation5 + $0x18] sm:$0xf]
    %v142 = vld [vmem:[#allocation5 + $0x1c] sm:$0xf]
    %v143 = vld [vmem:[#allocation5 + $0x20] sm:$0xf]
    %v144 = vld [vmem:[#allocation5 + $0x24] sm:$0xf]
    %v145 = vld [vmem:[#allocation5 + $0x28] sm:$0xf]
    %v146 = vld [vmem:[#allocation5 + $0x2c] sm:$0xf]
    %v147 = vld [vmem:[#allocation5 + $0x30] sm:$0xf]
    %v148 = vld [vmem:[#allocation5 + $0x34] sm:$0xf]
    %v149 = vld [vmem:[#allocation5 + $0x38] sm:$0xf]
    %v150 = vld [vmem:[#allocation5 + $0x3c] sm:$0xf]
    %v151 = vld [vmem:[#allocation5 + $0x40] sm:$0xf]
    %v152 = vld [vmem:[#allocation5 + $0x44] sm:$0xf]
    %v153 = vld [vmem:[#allocation5 + $0x48] sm:$0xf]
    %v154 = vld [vmem:[#allocation5 + $0x4c] sm:$0xf]
    %v155 = vld [vmem:[#allocation5 + $0x50] sm:$0xf]
    %v156 = vld [vmem:[#allocation5 + $0x54] sm:$0xf]
    %v157 = vld [vmem:[#allocation5 + $0x58] sm:$0xf]
    %v158 = vld [vmem:[#allocation5 + $0x5c] sm:$0xf]
    %v159 = vld [vmem:[#allocation5 + $0x60] sm:$0xf]
    %v160 = vld [vmem:[#allocation5 + $0x64] sm:$0xf]
    %v161 = vld [vmem:[#allocation5 + $0x68] sm:$0xf]
    %v162 = vld [vmem:[#allocation5 + $0x6c] sm:$0xf]
    %v163 = vld [vmem:[#allocation5 + $0x70] sm:$0xf]
    %v164 = vld [vmem:[#allocation5 + $0x74] sm:$0xf]
    %v165 = vld [vmem:[#allocation5 + $0x78] sm:$0xf]
    %v166 = vld [vmem:[#allocation5 + $0x7c] sm:$0xf]
    %v167 = vld [vmem:[#allocation5 + $0x80] sm:$0xf]
    %v168 = vld [vmem:[#allocation5 + $0x84] sm:$0xf]
    %v169 = vld [vmem:[#allocation5 + $0x88] sm:$0xf]
    %v170 = vld [vmem:[#allocation5 + $0x8c] sm:$0xf]
    %v171 = vld [vmem:[#allocation5 + $0x90] sm:$0xf]
    %v172 = vld [vmem:[#allocation5 + $0x94] sm:$0xf]
    %v173 = vld [vmem:[#allocation5 + $0x98] sm:$0xf]
    %v174 = vld [vmem:[#allocation5 + $0x9c] sm:$0xf]
    %v175 = vld [vmem:[#allocation5 + $0xa0] sm:$0xf]
    %v176 = vld [vmem:[#allocation5 + $0xa4] sm:$0xf]
    %v177 = vld [vmem:[#allocation5 + $0xa8] sm:$0xf]
    %v178 = vld [vmem:[#allocation5 + $0xac] sm:$0xf]
    %v179 = vld [vmem:[#allocation5 + $0xb0] sm:$0xf]
    %v180 = vld [vmem:[#allocation5 + $0xb4] sm:$0xf]
    %v181 = vld [vmem:[#allocation5 + $0xb8] sm:$0xf]
    %v182 = vld [vmem:[#allocation5 + $0xbc] sm:$0xf]
    %v183 = vcombine.low %v94, %v101
    %v184 = vcombine.low %v102, %v126
    %v185 = vcombine.low %v133, %v134
    %v187 = vunpack.c.l.s4 1966171168
    %v188 = vunpack.c.0.s8 %v187
    %v189 = vlaneseq
    %v190 = vshrl.u32 %v189, 7
    %v191 = vsub.s32 %v188, %v190
    %v192 = vrot.slane %v183, %v191
    %v194 = vunpack.c.l.s4 1966171168
    %v195 = vunpack.c.0.s8 %v194
    %v196 = vlaneseq
    %v197 = vshrl.u32 %v196, 7
    %v198 = vsub.s32 %v195, %v197
    %v199 = vrot.slane %v184, %v198
    %v201 = vunpack.c.l.s4 1966171168
    %v202 = vunpack.c.0.s8 %v201
    %v203 = vlaneseq
    %v204 = vshrl.u32 %v203, 7
    %v205 = vsub.s32 %v202, %v204
    %v206 = vrot.slane %v185, %v205
    %v207 = vcombine.low %v192, %v199
    %v208 = vcombine.high %v192, %v199
    %v209 = vcombine.high %v206, %v206
    %v211 = vunpack.c.l.s4 1966171168
    %v212 = vunpack.c.0.s8 %v211
    %v213 = vlaneseq
    %v214 = vshrl.u32 %v213, 7
    %v215 = vsub.s32 %v212, %v214
    %v216 = vrot.slane %v207, %v215
    %v218 = vunpack.c.l.s4 1966171168
    %v219 = vunpack.c.0.s8 %v218
    %v220 = vlaneseq
    %v221 = vshrl.u32 %v220, 7
    %v222 = vsub.s32 %v219, %v221
    %v223 = vrot.slane %v208, %v222
    %v225 = vunpack.c.l.s4 1966171168
    %v226 = vunpack.c.0.s8 %v225
    %v227 = vlaneseq
    %v228 = vshrl.u32 %v227, 7
    %v229 = vsub.s32 %v226, %v228
    %v230 = vrot.slane %v206, %v229
    %v232 = vunpack.c.l.s4 1966171168
    %v233 = vunpack.c.0.s8 %v232
    %v234 = vlaneseq
    %v235 = vshrl.u32 %v234, 7
    %v236 = vsub.s32 %v233, %v235
    %v237 = vrot.slane %v209, %v236
    %v238 = vcombine.low %v216, %v230
    %v239 = vcombine.high %v216, %v230
    %v240 = vcombine.low %v223, %v237
    %v292 = vunpack.c.l.b16 %v135
    %v293 = vunpack.c.l.b16 %v136
    %v294 = vunpack.c.l.b16 %v137
    %v295 = vunpack.c.l.b16 %v138
    %v296 = vunpack.c.l.b16 %v139
    %v297 = vunpack.c.l.b16 %v140
    %v298 = vunpack.c.l.b16 %v141
    %v299 = vunpack.c.l.b16 %v142
    %v300 = vunpack.c.l.b16 %v143
    %v301 = vunpack.c.l.b16 %v144
    %v302 = vunpack.c.l.b16 %v145
    %v303 = vunpack.c.l.b16 %v146
    %v304 = vunpack.c.l.b16 %v147
    %v305 = vunpack.c.l.b16 %v148
    %v306 = vunpack.c.l.b16 %v149
    %v307 = vunpack.c.l.b16 %v150
    %v308 = vunpack.c.l.b16 %v151
    %v309 = vunpack.c.l.b16 %v152
    %v310 = vunpack.c.l.b16 %v153
    %v311 = vunpack.c.l.b16 %v154
    %v312 = vunpack.c.l.b16 %v155
    %v313 = vunpack.c.l.b16 %v156
    %v314 = vunpack.c.l.b16 %v157
    %v315 = vunpack.c.l.b16 %v158
    %v316 = vunpack.c.l.b16 %v159
    %v317 = vunpack.c.l.b16 %v160
    %v318 = vunpack.c.l.b16 %v161
    %v319 = vunpack.c.l.b16 %v162
    %v320 = vunpack.c.l.b16 %v163
    %v321 = vunpack.c.l.b16 %v164
    %v322 = vunpack.c.l.b16 %v165
    %v323 = vunpack.c.l.b16 %v166
    %v324 = vunpack.c.l.b16 %v167
    %v325 = vunpack.c.l.b16 %v168
    %v326 = vunpack.c.l.b16 %v169
    %v327 = vunpack.c.l.b16 %v170
    %v328 = vunpack.c.l.b16 %v171
    %v329 = vunpack.c.l.b16 %v172
    %v330 = vunpack.c.l.b16 %v173
    %v331 = vunpack.c.l.b16 %v174
    %v332 = vunpack.c.l.b16 %v175
    %v333 = vunpack.c.l.b16 %v176
    %v334 = vunpack.c.l.b16 %v177
    %v335 = vunpack.c.l.b16 %v178
    %v336 = vunpack.c.l.b16 %v179
    %v337 = vunpack.c.l.b16 %v180
    %v338 = vunpack.c.l.b16 %v181
    %v339 = vunpack.c.l.b16 %v182
    %v340 = vpack.c.b16 %v293, %v292
    %v341 = vpack.c.b16 %v295, %v294
    %v342 = vpack.c.b16 %v297, %v296
    %v343 = vpack.c.b16 %v299, %v298
    %v344 = vpack.c.b16 %v301, %v300
    %v345 = vpack.c.b16 %v303, %v302
    %v346 = vpack.c.b16 %v305, %v304
    %v347 = vpack.c.b16 %v307, %v306
    %v348 = vpack.c.b16 %v309, %v308
    %v349 = vpack.c.b16 %v311, %v310
    %v350 = vpack.c.b16 %v313, %v312
    %v351 = vpack.c.b16 %v315, %v314
    %v352 = vpack.c.b16 %v317, %v316
    %v353 = vpack.c.b16 %v319, %v318
    %v354 = vpack.c.b16 %v321, %v320
    %v355 = vpack.c.b16 %v323, %v322
    %v356 = vpack.c.b16 %v325, %v324
    %v357 = vpack.c.b16 %v327, %v326
    %v358 = vpack.c.b16 %v329, %v328
    %v359 = vpack.c.b16 %v331, %v330
    %v360 = vpack.c.b16 %v333, %v332
    %v361 = vpack.c.b16 %v335, %v334
    %v362 = vpack.c.b16 %v337, %v336
    %v363 = vpack.c.b16 %v339, %v338
    %388 = vmatprep.subr.bf16.mxu0 0
    %389 = vmatpush1.bf16.msra.mxu0 %v340
    %390 = vmatprep.subr.bf16.mxu0 0
    %391 = vmatpush1.bf16.msra.mxu0 %v341
    %392 = vmatprep.subr.bf16.mxu0 0
    %393 = vmatpush1.bf16.msra.mxu0 %v342
    %394 = vmatprep.subr.bf16.mxu0 0
    %395 = vmatpush1.bf16.msra.mxu0 %v343
    %396 = vmatprep.subr.bf16.mxu0 0
    %397 = vmatpush1.bf16.msra.mxu0 %v344
    %398 = vmatprep.subr.bf16.mxu0 0
    %399 = vmatpush1.bf16.msra.mxu0 %v345
    %400 = vmatprep.subr.bf16.mxu0 0
    %401 = vmatpush1.bf16.msra.mxu0 %v346
    %402 = vmatprep.subr.bf16.mxu0 0
    %403 = vmatpush1.bf16.msra.mxu0 %v347
    %404 = vmatprep.subr.bf16.mxu0 0
    %405 = vmatpush1.bf16.msra.mxu0 %v348
    %406 = vmatprep.subr.bf16.mxu0 0
    %407 = vmatpush1.bf16.msra.mxu0 %v349
    %408 = vmatprep.subr.bf16.mxu0 0
    %409 = vmatpush1.bf16.msra.mxu0 %v350
    %410 = vmatprep.subr.bf16.mxu0 0
    %411 = vmatpush1.bf16.msra.mxu0 %v351
    %412 = vmatprep.subr.bf16.mxu0 0
    %413 = vmatpush1.bf16.msra.mxu0 %v352
    %414 = vmatprep.subr.bf16.mxu0 0
    %415 = vmatpush1.bf16.msra.mxu0 %v353
    %416 = vmatprep.subr.bf16.mxu0 0
    %417 = vmatpush1.bf16.msra.mxu0 %v354
    %418 = vmatprep.subr.bf16.mxu0 0
    %419 = vmatpush1.bf16.msra.mxu0 %v355
    %420 = vmatprep.mubr.bf16.mxu0 %v240
    %421 = vmatmul.mubr.bf16.gmra.mrb[0].mxu0 %v238
    %v422 = vpop.f32.mrb[0].mxu0
    %v423 = vadd.f32 0.0, %v422
    %v424 = vpop.f32.mrb[0].mxu0
    %v425 = vpop.f32.mrb[0].mxu0
    %v426 = vadd.f32 0.0, %v425
    %v427 = vpop.f32.mrb[0].mxu0
    %428 = vdwg.mxu0
    %429 = vmatprep.subr.bf16.mxu0 0
    %430 = vmatpush1.bf16.msra.mxu0 %v356
    %431 = vmatprep.subr.bf16.mxu0 0
    %432 = vmatpush1.bf16.msra.mxu0 %v357
    %433 = vmatprep.subr.bf16.mxu0 0
    %434 = vmatpush1.bf16.msra.mxu0 %v358
    %435 = vmatprep.subr.bf16.mxu0 0
    %436 = vmatpush1.bf16.msra.mxu0 %v359
    %437 = vmatprep.subr.bf16.mxu0 0
    %438 = vmatpush1.bf16.msra.mxu0 %v360
    %439 = vmatprep.subr.bf16.mxu0 0
    %440 = vmatpush1.bf16.msra.mxu0 %v361
    %441 = vmatprep.subr.bf16.mxu0 0
    %442 = vmatpush1.bf16.msra.mxu0 %v362
    %443 = vmatprep.subr.bf16.mxu0 0
    %444 = vmatpush1.bf16.msra.mxu0 %v363
    %445 = vmatprep.subr.bf16.mxu0 0
    %446 = vmatpush1.bf16.msra.mxu0 0
    %447 = vmatprep.subr.bf16.mxu0 0
    %448 = vmatpush1.bf16.msra.mxu0 0
    %449 = vmatprep.subr.bf16.mxu0 0
    %450 = vmatpush1.bf16.msra.mxu0 0
    %451 = vmatprep.subr.bf16.mxu0 0
    %452 = vmatpush1.bf16.msra.mxu0 0
    %453 = vmatprep.subr.bf16.mxu0 0
    %454 = vmatpush1.bf16.msra.mxu0 0
    %455 = vmatprep.subr.bf16.mxu0 0
    %456 = vmatpush1.bf16.msra.mxu0 0
    %457 = vmatprep.subr.bf16.mxu0 0
    %458 = vmatpush1.bf16.msra.mxu0 0
    %459 = vmatprep.subr.bf16.mxu0 0
    %460 = vmatpush1.bf16.msra.mxu0 0
    %461 = vmatprep.mubr.bf16.mxu0 0
    %462 = vmatmul.mubr.bf16.gmra.mrb[0].mxu0 %v239
    %v463 = vpop.f32.mrb[0].mxu0
    %v464 = vadd.f32 %v423, %v463
    %v465 = vpop.f32.mrb[0].mxu0
    %v466 = vpop.f32.mrb[0].mxu0
    %v467 = vadd.f32 %v426, %v466
    %v468 = vpop.f32.mrb[0].mxu0
    %469 = vdwg.mxu0
    %v472 = vcombine.high %v464, %v464
    %v474 = vunpack.c.l.s4 1983009808
    %v475 = vunpack.c.0.s8 %v474
    %v476 = vlaneseq
    %v477 = vshrl.u32 %v476, 7
    %v478 = vsub.s32 %v475, %v477
    %v479 = vrot.slane %v464, %v478
    %v481 = vunpack.c.l.s4 1983009808
    %v482 = vunpack.c.0.s8 %v481
    %v483 = vlaneseq
    %v484 = vshrl.u32 %v483, 7
    %v485 = vsub.s32 %v482, %v484
    %v486 = vrot.slane %v472, %v485
    %v487 = vcombine.high %v479, %v479
    %v488 = vcombine.high %v486, %v486
    %v490 = vunpack.c.l.s4 1983009808
    %v491 = vunpack.c.0.s8 %v490
    %v492 = vlaneseq
    %v493 = vshrl.u32 %v492, 7
    %v494 = vsub.s32 %v491, %v493
    %v495 = vrot.slane %v467, %v494
    %v496 = vcombine.high %v495, %v495
    %v497 = vcombine.low %v479, %v487
    %v499 = vunpack.c.l.s4 1983009808
    %v500 = vunpack.c.0.s8 %v499
    %v501 = vlaneseq
    %v502 = vshrl.u32 %v501, 7
    %v503 = vsub.s32 %v500, %v502
    %v504 = vrot.slane %v497, %v503
    %v506 = vunpack.c.l.s4 1983009808
    %v507 = vunpack.c.0.s8 %v506
    %v508 = vlaneseq
    %v509 = vshrl.u32 %v508, 7
    %v510 = vsub.s32 %v507, %v509
    %v511 = vrot.slane %v486, %v510
    %v512 = vcombine.low %v504, %v511
    %v513 = vcombine.low %v488, %v495
    %v515 = vunpack.c.l.s4 1983009808
    %v516 = vunpack.c.0.s8 %v515
    %v517 = vlaneseq
    %v518 = vshrl.u32 %v517, 7
    %v519 = vsub.s32 %v516, %v518
    %v520 = vrot.slane %v513, %v519
    %v522 = vunpack.c.l.s4 1983009808
    %v523 = vunpack.c.0.s8 %v522
    %v524 = vlaneseq
    %v525 = vshrl.u32 %v524, 7
    %v526 = vsub.s32 %v523, %v525
    %v527 = vrot.slane %v496, %v526
    %v528 = vcombine.low %v520, %v527
    %v531 = vpack.c.bf16 %v512, %v512
    %v532 = vpack.c.bf16 %v528, %v528
    %533 = vst [vmem:[%s4] sm:$0x7] %v531
    %534 = vst [vmem:[%s4 + $0x4] sm:$0x7] %v532
    %vm535 = vcmask 1043456
    %v536 = vsel %vm535, %v467, 0.0
    %v537 = vadd.f32 %v464, %v536
    %v538 = vrot.slane %v537, 4
    %v539 = vadd.f32 %v537, %v538
    %v540 = vrot.slane %v539, 2
    %v541 = vadd.f32 %v539, %v540
    %v542 = vrot.slane %v541, 1
    %v543 = vadd.f32 %v541, %v542
    %v544 = vmul.f32 %v464, %v464
    %v545 = vmul.f32 %v467, %v467
    %v546 = vsel %vm535, %v545, 0.0
    %v547 = vadd.f32 %v544, %v546
    %v548 = vrot.slane %v547, 4
    %v549 = vadd.f32 %v547, %v548
    %v550 = vrot.slane %v549, 2
    %v551 = vadd.f32 %v549, %v550
    %v552 = vrot.slane %v551, 1
    %v553 = vadd.f32 %v551, %v552
    %vm554 = vcmask 1040384
    %v555 = vsel %vm554, %v543, %v553
    %556 = vst [vmem:[#allocation7] sm:$0x3] %v555
    // Predicated region
    $region26: #{tpu_custom_call.1} parent=1 // pred_check
      _
    $region27: #{tpu_custom_call.1} parent=1 // pred_check_branch
      %558 = sbr.rel (0) target = $region29
    $region28: #{tpu_custom_call.1} parent=1 // pred_region
      _
    $region29: #{tpu_custom_call.1} parent=1 // pred_fallthru
      _
    // Predicated region
    $region30: #{tpu_custom_call.1} parent=1 // pred_check
      _
    $region31: #{tpu_custom_call.1} parent=1 // pred_check_branch
      %560 = sbr.rel (0) target = $region33
    $region32: #{tpu_custom_call.1} parent=1 // pred_region
      %s562 = ssub.s32 32, 32
      %563 = vsyncadd [#allocation4], %s562
      %s565 = sshll.u32 [#allocation7], 4
      %s566 = int_to_ptr.vmem [resolvable:$true] %s565
      %568 = dma.vmem_to_hbm [thread:$0]  %s566, 32, %s5, [#allocation4]
    $region33: #{tpu_custom_call.1} parent=1 // pred_fallthru
      _
    // Predicated region
    $region34: #{tpu_custom_call.1} parent=1 // pred_check
      _
    $region35: #{tpu_custom_call.1} parent=1 // pred_check_branch
      %570 = sbr.rel (0) target = $region37
    $region36: #{tpu_custom_call.1} parent=1 // pred_region
      _
    $region37: #{tpu_custom_call.1} parent=1 // pred_fallthru
      _
    // Predicated region
    $region38: #{tpu_custom_call.1} parent=1 // pred_check
      _
    $region39: #{tpu_custom_call.1} parent=1 // pred_check_branch
      %572 = sbr.rel (0) target = $region41
    $region40: #{tpu_custom_call.1} parent=1 // pred_region
      %573 = dma.done [#allocation4], 32
    $region41: #{tpu_custom_call.1} parent=1 // pred_fallthru
      _
    %574 = vsyncpa [#allocation3], 1
    %575 = vsyncpa [#allocation6], 1
    %576 = vsyncpa [#allocation4], 1

</llo_original>
